<compile_context>
chip_gen: v6e
topology: v6e:2x2x1
jax: 0.10.0
libtpu: 0.0.40
codegen_flags: <defaults>
</compile_context>

<pallas_src>
import functools

import jax
import jax.numpy as jnp
from jax.experimental import pallas as pl
from jax.experimental.pallas import tpu as pltpu


def _round_up(x: int, m: int) -> int:
    return (x + m - 1) // m * m


def _embed_kernel(ids_ref, w_ref, o_ref, *, using_bf16: bool):
    """Gather one (T, D) tile of embedding rows via a one-hot MXU contraction.

    ids_ref : VMEM (T, 1) int32   -- token ids for this tile
    w_ref   : VMEM (V, D)         -- full embedding table, single-buffered resident
    o_ref   : VMEM (T, D)         -- output tile (one full lane-dense store)
    """
    V = w_ref.shape[0]
    T = o_ref.shape[0]

    ids = ids_ref[...]                                        # (T, 1) int32
    col = jax.lax.broadcasted_iota(jnp.int32, (T, V), 1)      # vocab id per lane
    # One-hot selector. Out-of-range ids produce an all-zero output row
    # (never an out-of-bounds VMEM read).
    onehot = jnp.where(ids == col, 1.0, 0.0)                  # (T, V) float32

    if using_bf16:
        # bf16 path: contracting in bf16 (one-hot entries are exact in bf16,
        # accumulation in f32) is bit-identical to gathering from a bf16 table
        # and then casting back to f32 (torch's `.float()`).  The fp32 table is
        # cast per-tile in VMEM; it is never rewritten in HBM.
        acc = jnp.dot(onehot.astype(jnp.bfloat16),
                      w_ref[...].astype(jnp.bfloat16),
                      preferred_element_type=jnp.float32)
    else:
        acc = jnp.dot(onehot, w_ref[...].astype(jnp.float32),
                      preferred_element_type=jnp.float32)

    o_ref[...] = acc.astype(o_ref.dtype)


def got_embedding(input_ids, weight, *, using_bf16=False, tokens_per_block=256):
    """Pallas implementation of GOTEmbedding.forward.

    input_ids : int array, any shape (flattened, like torch.nn.Embedding)
    weight    : (V, D) embedding table (kept fp32 in HBM even for the bf16 path)
    returns   : (1, N, D); float32 when using_bf16 else weight.dtype
    """
    V, D = weight.shape
    out_dtype = jnp.float32 if using_bf16 else weight.dtype

    ids_flat = jnp.reshape(input_ids, (-1,)).astype(jnp.int32)
    N = int(ids_flat.shape[0])

    # Large lane-dense tiles, but never pad a tiny request up to a huge tile.
    T = max(8, min(_round_up(tokens_per_block, 8), _round_up(N, 8)))
    Npad = _round_up(N, T)
    # Padded ids are 0 -> they gather row 0 into the padded tail, which is
    # sliced off below before the caller ever sees it.
    ids_col = jnp.pad(ids_flat, (0, Npad - N)).reshape(Npad, 1)

    table_bytes = int(V * D * weight.dtype.itemsize)
    out_itemsize = int(jnp.dtype(out_dtype).itemsize)
    # Scoped-VMEM budget: single-buffered resident table + double-buffered
    # (T, D) output tile + (T, 1) ids tile (lane-padded) + one-hot temporary.
    vmem_needed = (table_bytes
                   + 2 * T * D * out_itemsize
                   + 2 * T * 128 * 4
                   + T * V * 4
                   + (8 << 20))
    vmem_limit = int(min(127 << 20, max(vmem_needed, 32 << 20)))

    cost = pl.CostEstimate(
        flops=2 * Npad * V * D,                 # one-hot contraction on the MXU
        transcendentals=0,
        bytes_accessed=int(table_bytes + Npad * D * out_itemsize + Npad * 4),
    )

    kernel = functools.partial(_embed_kernel, using_bf16=using_bf16)

    out = pl.pallas_call(
        kernel,
        out_shape=jax.ShapeDtypeStruct((Npad, D), out_dtype),
        grid=(Npad // T,),
        in_specs=[
            # token-id tile for this grid step
            pl.BlockSpec((T, 1), lambda i: (i, 0)),
            # whole table resident in VMEM, single-buffered (not pipelined)
            pl.BlockSpec(memory_space=pltpu.MemorySpace.VMEM),
        ],
        out_specs=pl.BlockSpec((T, D), lambda i: (i, 0)),
        compiler_params=pltpu.CompilerParams(
            dimension_semantics=("parallel",),   # independent tiles -> v7x megacore
            vmem_limit_bytes=vmem_limit,
        ),
        cost_estimate=cost,
    )(ids_col, weight)

    # torch: res.view(1, -1, embed_dim); drop the padded tail.
    return jnp.reshape(out[:N], (1, N, D))


if __name__ == "__main__":
    key = jax.random.PRNGKey(0)
    k_w, k_ids = jax.random.split(key)

    VOCAB, EMBED_DIM, SEQ = 512, 256, 300   # small, but exercises multi-tile + padding

    weight = jax.random.normal(k_w, (VOCAB, EMBED_DIM), dtype=jnp.float32)
    input_ids = jax.random.randint(k_ids, (1, SEQ), 0, VOCAB, dtype=jnp.int32)

    # --- bf16 path (the GOT-OCR export configuration) ---
    out_bf16 = jax.block_until_ready(got_embedding(input_ids, weight, using_bf16=True))
    ref_bf16 = jnp.take(weight.astype(jnp.bfloat16), input_ids.reshape(-1), axis=0)
    ref_bf16 = ref_bf16.astype(jnp.float32).reshape(1, SEQ, EMBED_DIM)
    assert out_bf16.shape == (1, SEQ, EMBED_DIM), out_bf16.shape
    assert out_bf16.dtype == jnp.float32, out_bf16.dtype
    assert jnp.allclose(out_bf16, ref_bf16, rtol=1e-2, atol=1e-3), "bf16 path mismatch"

    # --- fp32 path ---
    out_f32 = jax.block_until_ready(got_embedding(input_ids, weight, using_bf16=False))
    ref_f32 = jnp.take(weight, input_ids.reshape(-1), axis=0).reshape(1, SEQ, EMBED_DIM)
    assert out_f32.shape == (1, SEQ, EMBED_DIM), out_f32.shape
    assert out_f32.dtype == jnp.float32, out_f32.dtype
    assert jnp.allclose(out_f32, ref_f32, rtol=1e-4, atol=1e-5), "fp32 path mismatch"

    print("KERNEL_OK")
</pallas_src>

<mosaic_0001>
module attributes {stable_mosaic.version = 11 : i64} {
  func.func @_embed_kernel(%arg0: i32, %arg1: memref<256x1xi32, #tpu.memory_space<vmem>>, %arg2: memref<512x256xf32, #tpu.memory_space<vmem>>, %arg3: memref<256x256xf32, #tpu.memory_space<vmem>>) attributes {dimension_semantics = [#tpu.dimension_semantics<parallel>], iteration_bounds = array<i64: 2>, scalar_prefetch = 0 : i64, scratch_operands = 0 : i64, tpu.core_type = #tpu.core_type<tc>, window_params = [{transform_indices = @transform_0, window_bounds = array<i64: 256, 1>}, {pipeline_mode = #tpu.pipeline_mode<synchronous>, transform_indices = @transform_1, window_bounds = array<i64: 512, 256>}, {transform_indices = @transform_2, window_bounds = array<i64: 256, 256>}]} {
    %c0 = arith.constant 0 : index
    %c0_0 = arith.constant 0 : index
    %0 = vector.load %arg1[%c0, %c0_0] : memref<256x1xi32, #tpu.memory_space<vmem>>, vector<256x1xi32>
    %1 = tpu.iota {dimensions = array<i32: 1>} : vector<256x512xi32>
    %2 = vector.broadcast %0 : vector<256x1xi32> to vector<256x512xi32>
    %3 = arith.cmpi eq, %2, %1 : vector<256x512xi32>
    %cst = arith.constant 1.000000e+00 : f32
    %cst_1 = arith.constant 0.000000e+00 : f32
    %4 = vector.broadcast %cst : f32 to vector<256x512xf32>
    %5 = vector.broadcast %cst_1 : f32 to vector<256x512xf32>
    %6 = arith.select %3, %4, %5 : vector<256x512xi1>, vector<256x512xf32>
    %7 = arith.truncf %6 : vector<256x512xf32> to vector<256x512xbf16>
    %c0_2 = arith.constant 0 : index
    %c0_3 = arith.constant 0 : index
    %8 = vector.load %arg2[%c0_2, %c0_3] : memref<512x256xf32, #tpu.memory_space<vmem>>, vector<512x256xf32>
    %9 = arith.truncf %8 : vector<512x256xf32> to vector<512x256xbf16>
    %cst_4 = arith.constant dense<0.000000e+00> : vector<256x256xf32>
    %10 = tpu.matmul %7, %9, %cst_4 {dimension_numbers = #tpu.dot_dimension_numbers<[1], [0], [0], [1], [0, 0, 1, 1], [], []>} : vector<256x512xbf16>, vector<512x256xbf16>, vector<256x256xf32> -> vector<256x256xf32>
    %c0_5 = arith.constant 0 : index
    %c0_6 = arith.constant 0 : index
    %11 = vector.load %arg3[%c0_5, %c0_6] : memref<256x256xf32, #tpu.memory_space<vmem>>, vector<256x256xf32>
    tpu.vector_store %arg3[%c0_5, %c0_6], %10 {strides = array<i32>} : memref<256x256xf32, #tpu.memory_space<vmem>>, vector<256x256xf32>,
    return
  }
  func.func @transform_0(%arg0: i32) -> (i32, i32) {
    %c0_i32 = arith.constant 0 : i32
    %c0_i32_0 = arith.constant 0 : i32
    return %arg0, %c0_i32 : i32, i32
  }
  func.func @transform_1(%arg0: i32) -> (i32, i32) {
    %c0_i32 = arith.constant 0 : i32
    %c0_i32_0 = arith.constant 0 : i32
    %c0_i32_1 = arith.constant 0 : i32
    return %c0_i32, %c0_i32_0 : i32, i32
  }
  func.func @transform_2(%arg0: i32) -> (i32, i32) {
    %c0_i32 = arith.constant 0 : i32
    %c0_i32_0 = arith.constant 0 : i32
    return %arg0, %c0_i32 : i32, i32
  }
}

</mosaic_0001>

<llo_original>
// kernel: tpu_custom_call.1
$region0: #{tpu_custom_call.1}
  #allocation0 [shape = 'u32[]', space=smem, size = 0x4, offset = 0x4, fixed_abs, tag = 'smem constant byte address 0x4 - core index']
  #allocation1 [shape = 'u32[144,128]{1,0:T(1,128)}', space=vmem, size = 0x12000, scoped, tag = 'internal scratch']
  %s0 = inlined_call_operand.vmem [shape: s32[512,1], index: 0, kind: input, shape index: {}]
  %s1 = inlined_call_operand.hbm [shape: f32[512,256], index: 1, kind: input, shape index: {}]
  %s2 = inlined_call_operand.hbm [shape: f32[512,256], index: 2, kind: output, shape index: {}]
  %s3 = sld [smem:[#allocation0]]
  $region45: #{tpu_custom_call.1} parent=0
    _
  %s5 = ssub.s32 1, %s3
  %s6 = scalar_select 0, %s5, %s3
  $region1: #{tpu_custom_call.1} parent=0
    #allocation2 [shape = 'u8[524288]{0}', space=vmem, size = 0x80000, scoped, tag = 'input window, operand 1, single buffered']
    #allocation3 [shape = 's32[2]{0}', space=sflag, size = 0x8, scoped, tag = 'scoped memory for tpu_custom_call.1']
    #allocation4 [shape = 's32[2]{0}', space=sflag, size = 0x8, scoped, tag = 'scoped memory for tpu_custom_call.1']
    #allocation5 [shape = 'u8[524288]{0}', space=vmem, size = 0x80000, scoped, tag = 'output window, operand 0']
    %7 = vsyncpa [#allocation3], 0
    %8 = vsyncpa [#allocation4], 0
    %s9 = scalar_lea.sflag [#allocation4], 1
    %10 = vsyncpa %s9, 0
    loop: start=0, step=1, limit=4
    $region2: #{tpu_custom_call.1} parent=1 // loop_pre_header
      _
    $region3: #{tpu_custom_call.1} parent=1 // loop_header
      %s12 = sphi 0, %s16
      %p13 = scmp.ge.s32.totalorder %s12, 4
      %s22 = sphi 0, %s24
      %s25 = sphi 0, %s22
      %s26 = sphi 0, %s25
      %s42 = sphi 0, %s26
      %s46 = sphi 0, %s46
      %s48 = sphi 0, %s46
      %s49 = sphi 0, %s48
      %s63 = sphi 0, %s49
      %s69 = sphi 0, %s71
      %s72 = sphi 0, %s69
      %s73 = sphi 0, %s72
      %s89 = sphi 0, %s73
    $region4: #{tpu_custom_call.1} parent=1 // loop_header_branch
      %15 = sbr.rel (%p13) target = $region8
    $region5: #{tpu_custom_call.1} parent=1 // loop_body
      %s17 = ssub.s32 %s12, 1
      %s18 = ssub.s32 %s12, 2
      %s19 = sadd.s32 %s12, 1
      %s20 = ssub.s32 %s12, %s19
      %p21 = scmp.eq.s32.totalorder %s20, 0
      %s23 = sadd.s32 %s22, 1
      %s24 = scalar_select %p21, %s22, %s23
      %p27 = pneg %p21
      %p28 = scmp.eq.s32.totalorder %s12, 1
      %p29 = por %p27, %p28
      %p30 = scmp.ne.s32.totalorder %s22, %s25
      %p31 = scmp.eq.s32.totalorder %s12, 0
      %p32 = por %p30, %p31
      %p33 = scmp.ne.s32.totalorder %s22, %s25
      %p34 = scmp.eq.s32.totalorder %s17, 1
      %p35 = por %p33, %p34
      %p36 = scmp.ne.s32.totalorder %s25, %s26
      %p37 = scmp.eq.s32.totalorder %s17, 0
      %p38 = por %p36, %p37
      %p39 = scmp.ne.s32.totalorder %s25, %s26
      %p40 = scmp.eq.s32.totalorder %s18, 1
      %p41 = por %p39, %p40
      %p43 = scmp.ne.s32.totalorder %s26, %s42
      %p44 = scmp.eq.s32.totalorder %s18, 0
      %p45 = por %p43, %p44
      %s47 = sadd.s32 %s46, 1
      %p50 = scmp.eq.s32.totalorder %s12, 1
      %p51 = scmp.ne.s32.totalorder %s46, %s48
      %p52 = scmp.eq.s32.totalorder %s12, 0
      %p53 = por %p51, %p52
      %p54 = scmp.ne.s32.totalorder %s46, %s48
      %p55 = scmp.eq.s32.totalorder %s17, 1
      %p56 = por %p54, %p55
      %p57 = scmp.ne.s32.totalorder %s48, %s49
      %p58 = scmp.eq.s32.totalorder %s17, 0
      %p59 = por %p57, %p58
      %p60 = scmp.ne.s32.totalorder %s48, %s49
      %p61 = scmp.eq.s32.totalorder %s18, 1
      %p62 = por %p60, %p61
      %p64 = scmp.ne.s32.totalorder %s49, %s63
      %p65 = scmp.eq.s32.totalorder %s18, 0
      %p66 = por %p64, %p65
      %s67 = ssub.s32 %s12, %s19
      %p68 = scmp.eq.s32.totalorder %s67, 0
      %s70 = sadd.s32 %s69, 1
      %s71 = scalar_select %p68, %s69, %s70
      %p74 = pneg %p68
      %p75 = scmp.eq.s32.totalorder %s12, 1
      %p76 = por %p74, %p75
      %p77 = scmp.ne.s32.totalorder %s69, %s72
      %p78 = scmp.eq.s32.totalorder %s12, 0
      %p79 = por %p77, %p78
      %p80 = scmp.ne.s32.totalorder %s69, %s72
      %p81 = scmp.eq.s32.totalorder %s17, 1
      %p82 = por %p80, %p81
      %p83 = scmp.ne.s32.totalorder %s72, %s73
      %p84 = scmp.eq.s32.totalorder %s17, 0
      %p85 = por %p83, %p84
      %p86 = scmp.ne.s32.totalorder %s72, %s73
      %p87 = scmp.eq.s32.totalorder %s18, 1
      %p88 = por %p86, %p87
      %p90 = scmp.ne.s32.totalorder %s73, %s89
      %p91 = scmp.eq.s32.totalorder %s18, 0
      %p92 = por %p90, %p91
      %p93 = scmp.le.s32.totalorder 1, %s12
      %p94 = scmp.lt.s32.totalorder %s12, 3
      %p95 = pnand %p93, %p94
      %p96 = pneg %p95
      // Predicated region
      $region9: #{tpu_custom_call.1} parent=5 // pred_check
        _
      $region10: #{tpu_custom_call.1} parent=5 // pred_check_branch
        %98 = sbr.rel (%p95) target = $region12
      $region11: #{tpu_custom_call.1} parent=5 // pred_region
        %s99 = ssub.s32 %s12, 1
        // Predicated region
        $region13: #{tpu_custom_call.1} parent=11 // pred_check
          %p100 = pneg %p59
        $region14: #{tpu_custom_call.1} parent=11 // pred_check_branch
          %102 = sbr.rel (%p100) target = $region16
        $region15: #{tpu_custom_call.1} parent=11 // pred_region
          %s104 = ssub.s32 16384, 16384
          %105 = vsyncadd [#allocation3], %s104
          %s106 = sshll.u32 [#allocation2], 4
          %s107 = int_to_ptr.vmem [resolvable:$true] %s106
          %112 = dma.hbm_to_vmem [thread:$0]  %s1, 16384, %s107, [#allocation3], 256, 256, 16
        $region16: #{tpu_custom_call.1} parent=11 // pred_fallthru
          _
      $region12: #{tpu_custom_call.1} parent=5 // pred_fallthru
        _
      %p113 = scmp.lt.s32.totalorder %s12, 2
      // Predicated region
      $region17: #{tpu_custom_call.1} parent=5 // pred_check
        %p114 = pneg %p113
      $region18: #{tpu_custom_call.1} parent=5 // pred_check_branch
        %116 = sbr.rel (%p114) target = $region20
      $region19: #{tpu_custom_call.1} parent=5 // pred_region
        // Predicated region
        $region21: #{tpu_custom_call.1} parent=19 // pred_check
          %p117 = pneg %p32
        $region22: #{tpu_custom_call.1} parent=19 // pred_check_branch
          %119 = sbr.rel (%p117) target = $region24
        $region23: #{tpu_custom_call.1} parent=19 // pred_region
          %s120 = smul.u32 32, %s12
          %p121 = scmp.lt.s32.totalorder %s120, 63
          %s122 = scalar_select %p121, %s120, 63
          %s123 = smul.addr %s122, 8
          %s124 = scalar_lea.vmem %s0, %s123
          %s125 = smul.u32 32, %s12
        $region24: #{tpu_custom_call.1} parent=19 // pred_fallthru
          _
      $region20: #{tpu_custom_call.1} parent=5 // pred_fallthru
        _
      %p126 = scmp.le.s32.totalorder 1, %s12
      %p127 = scmp.lt.s32.totalorder %s12, 3
      %p128 = pnand %p126, %p127
      %p129 = pneg %p128
      // Predicated region
      $region25: #{tpu_custom_call.1} parent=5 // pred_check
        _
      $region26: #{tpu_custom_call.1} parent=5 // pred_check_branch
        %131 = sbr.rel (%p128) target = $region28
      $region27: #{tpu_custom_call.1} parent=5 // pred_region
        %s132 = ssub.s32 %s12, 1
        // Predicated region
        $region29: #{tpu_custom_call.1} parent=27 // pred_check
          %p133 = pneg %p59
        $region30: #{tpu_custom_call.1} parent=27 // pred_check_branch
          %135 = sbr.rel (%p133) target = $region32
        $region31: #{tpu_custom_call.1} parent=27 // pred_region
          %136 = dma.done [#allocation3], 16384
        $region32: #{tpu_custom_call.1} parent=27 // pred_fallthru
          _
        %s137 = smul.u32 32, %s17
        %p138 = scmp.lt.s32.totalorder %s137, 63
        %s139 = scalar_select %p138, %s137, 63
        %s140 = smul.addr %s139, 8
        %s141 = scalar_lea.vmem %s0, %s140
        %p142 = pneg %p38
        %p143 = pneg %p35
        %p144 = pneg %p59
        %p145 = pneg %p56
        %p146 = pneg %p85
        %p147 = pneg %p82
        %s148 = sand.u32 %s72, 1
        %s149 = scalar_lea.sflag [#allocation4], %s148
        %s150 = sand.u32 %s72, 1
        %s151 = smul.addr %s150, 512
        %s152 = scalar_lea.vmem [#allocation5], %s151
        %s153 = smul.u32 32, %s17
        %p154 = scmp.lt.s32.totalorder %s153, 63
        %s155 = scalar_select %p154, %s153, 63
        %s156 = smul.addr %s155, 8
        %s157 = scalar_lea.vmem %s0, %s156
        %s158 = smul.u32 32, %s17
        %s159 = smul.u32 32, %s17
        %v160 = vld [vmem:[%s157] sm:$0xff]
        %v161 = vld [vmem:[%s157 + $0x8] sm:$0xff]
        %v162 = vld [vmem:[%s157 + $0x10] sm:$0xff]
        %v163 = vld [vmem:[%s157 + $0x18] sm:$0xff]
        %v164 = vld [vmem:[%s157 + $0x20] sm:$0xff]
        %v165 = vld [vmem:[%s157 + $0x28] sm:$0xff]
        %v166 = vld [vmem:[%s157 + $0x30] sm:$0xff]
        %v167 = vld [vmem:[%s157 + $0x38] sm:$0xff]
        %v168 = vld [vmem:[%s157 + $0x40] sm:$0xff]
        %v169 = vld [vmem:[%s157 + $0x48] sm:$0xff]
        %v170 = vld [vmem:[%s157 + $0x50] sm:$0xff]
        %v171 = vld [vmem:[%s157 + $0x58] sm:$0xff]
        %v172 = vld [vmem:[%s157 + $0x60] sm:$0xff]
        %v173 = vld [vmem:[%s157 + $0x68] sm:$0xff]
        %v174 = vld [vmem:[%s157 + $0x70] sm:$0xff]
        %v175 = vld [vmem:[%s157 + $0x78] sm:$0xff]
        %v176 = vld [vmem:[%s157 + $0x80] sm:$0xff]
        %v177 = vld [vmem:[%s157 + $0x88] sm:$0xff]
        %v178 = vld [vmem:[%s157 + $0x90] sm:$0xff]
        %v179 = vld [vmem:[%s157 + $0x98] sm:$0xff]
        %v180 = vld [vmem:[%s157 + $0xa0] sm:$0xff]
        %v181 = vld [vmem:[%s157 + $0xa8] sm:$0xff]
        %v182 = vld [vmem:[%s157 + $0xb0] sm:$0xff]
        %v183 = vld [vmem:[%s157 + $0xb8] sm:$0xff]
        %v184 = vld [vmem:[%s157 + $0xc0] sm:$0xff]
        %v185 = vld [vmem:[%s157 + $0xc8] sm:$0xff]
        %v186 = vld [vmem:[%s157 + $0xd0] sm:$0xff]
        %v187 = vld [vmem:[%s157 + $0xd8] sm:$0xff]
        %v188 = vld [vmem:[%s157 + $0xe0] sm:$0xff]
        %v189 = vld [vmem:[%s157 + $0xe8] sm:$0xff]
        %v190 = vld [vmem:[%s157 + $0xf0] sm:$0xff]
        %v191 = vld [vmem:[%s157 + $0xf8] sm:$0xff]
        %v192 = vlaneseq
        %v193 = vand.u32 %v192, 127
        %v194 = vadd.s32 %v193, 128
        %v195 = vadd.s32 %v193, 256
        %v196 = vadd.s32 %v193, 384
        %197 = vset.pattern.permute.xlu0 0
        %198 = vperm.xlu0 %197, %v160
        %v199 = vpop.permute.xlu0 %198
        %200 = vset.pattern.permute.xlu0 0
        %201 = vperm.xlu0 %200, %v161
        %v202 = vpop.permute.xlu0 %201
        %203 = vset.pattern.permute.xlu0 0
        %204 = vperm.xlu0 %203, %v162
        %v205 = vpop.permute.xlu0 %204
        %206 = vset.pattern.permute.xlu0 0
        %207 = vperm.xlu0 %206, %v163
        %v208 = vpop.permute.xlu0 %207
        %209 = vset.pattern.permute.xlu0 0
        %210 = vperm.xlu0 %209, %v164
        %v211 = vpop.permute.xlu0 %210
        %212 = vset.pattern.permute.xlu0 0
        %213 = vperm.xlu0 %212, %v165
        %v214 = vpop.permute.xlu0 %213
        %215 = vset.pattern.permute.xlu0 0
        %216 = vperm.xlu0 %215, %v166
        %v217 = vpop.permute.xlu0 %216
        %218 = vset.pattern.permute.xlu0 0
        %219 = vperm.xlu0 %218, %v167
        %v220 = vpop.permute.xlu0 %219
        %221 = vset.pattern.permute.xlu0 0
        %222 = vperm.xlu0 %221, %v168
        %v223 = vpop.permute.xlu0 %222
        %224 = vset.pattern.permute.xlu0 0
        %225 = vperm.xlu0 %224, %v169
        %v226 = vpop.permute.xlu0 %225
        %227 = vset.pattern.permute.xlu0 0
        %228 = vperm.xlu0 %227, %v170
        %v229 = vpop.permute.xlu0 %228
        %230 = vset.pattern.permute.xlu0 0
        %231 = vperm.xlu0 %230, %v171
        %v232 = vpop.permute.xlu0 %231
        %233 = vset.pattern.permute.xlu0 0
        %234 = vperm.xlu0 %233, %v172
        %v235 = vpop.permute.xlu0 %234
        %236 = vset.pattern.permute.xlu0 0
        %237 = vperm.xlu0 %236, %v173
        %v238 = vpop.permute.xlu0 %237
        %239 = vset.pattern.permute.xlu0 0
        %240 = vperm.xlu0 %239, %v174
        %v241 = vpop.permute.xlu0 %240
        %242 = vset.pattern.permute.xlu0 0
        %243 = vperm.xlu0 %242, %v175
        %v244 = vpop.permute.xlu0 %243
        %245 = vset.pattern.permute.xlu0 0
        %246 = vperm.xlu0 %245, %v176
        %v247 = vpop.permute.xlu0 %246
        %248 = vset.pattern.permute.xlu0 0
        %249 = vperm.xlu0 %248, %v177
        %v250 = vpop.permute.xlu0 %249
        %251 = vset.pattern.permute.xlu0 0
        %252 = vperm.xlu0 %251, %v178
        %v253 = vpop.permute.xlu0 %252
        %254 = vset.pattern.permute.xlu0 0
        %255 = vperm.xlu0 %254, %v179
        %v256 = vpop.permute.xlu0 %255
        %257 = vset.pattern.permute.xlu0 0
        %258 = vperm.xlu0 %257, %v180
        %v259 = vpop.permute.xlu0 %258
        %260 = vset.pattern.permute.xlu0 0
        %261 = vperm.xlu0 %260, %v181
        %v262 = vpop.permute.xlu0 %261
        %263 = vset.pattern.permute.xlu0 0
        %264 = vperm.xlu0 %263, %v182
        %v265 = vpop.permute.xlu0 %264
        %266 = vset.pattern.permute.xlu0 0
        %267 = vperm.xlu0 %266, %v183
        %v268 = vpop.permute.xlu0 %267
        %269 = vset.pattern.permute.xlu0 0
        %270 = vperm.xlu0 %269, %v184
        %v271 = vpop.permute.xlu0 %270
        %272 = vset.pattern.permute.xlu0 0
        %273 = vperm.xlu0 %272, %v185
        %v274 = vpop.permute.xlu0 %273
        %275 = vset.pattern.permute.xlu0 0
        %276 = vperm.xlu0 %275, %v186
        %v277 = vpop.permute.xlu0 %276
        %278 = vset.pattern.permute.xlu0 0
        %279 = vperm.xlu0 %278, %v187
        %v280 = vpop.permute.xlu0 %279
        %281 = vset.pattern.permute.xlu0 0
        %282 = vperm.xlu0 %281, %v188
        %v283 = vpop.permute.xlu0 %282
        %284 = vset.pattern.permute.xlu0 0
        %285 = vperm.xlu0 %284, %v189
        %v286 = vpop.permute.xlu0 %285
        %287 = vset.pattern.permute.xlu0 0
        %288 = vperm.xlu0 %287, %v190
        %v289 = vpop.permute.xlu0 %288
        %290 = vset.pattern.permute.xlu0 0
        %291 = vperm.xlu0 %290, %v191
        %v292 = vpop.permute.xlu0 %291
        %vm293 = vcmp.eq.s32.totalorder %v199, %v193
        %vm294 = vcmp.eq.s32.totalorder %v199, %v194
        %vm295 = vcmp.eq.s32.totalorder %v199, %v195
        %vm296 = vcmp.eq.s32.totalorder %v199, %v196
        %vm297 = vcmp.eq.s32.totalorder %v202, %v193
        %vm298 = vcmp.eq.s32.totalorder %v202, %v194
        %vm299 = vcmp.eq.s32.totalorder %v202, %v195
        %vm300 = vcmp.eq.s32.totalorder %v202, %v196
        %vm301 = vcmp.eq.s32.totalorder %v205, %v193
        %vm302 = vcmp.eq.s32.totalorder %v205, %v194
        %vm303 = vcmp.eq.s32.totalorder %v205, %v195
        %vm304 = vcmp.eq.s32.totalorder %v205, %v196
        %vm305 = vcmp.eq.s32.totalorder %v208, %v193
        %vm306 = vcmp.eq.s32.totalorder %v208, %v194
        %vm307 = vcmp.eq.s32.totalorder %v208, %v195
        %vm308 = vcmp.eq.s32.totalorder %v208, %v196
        %vm309 = vcmp.eq.s32.totalorder %v211, %v193
        %vm310 = vcmp.eq.s32.totalorder %v211, %v194
        %vm311 = vcmp.eq.s32.totalorder %v211, %v195
        %vm312 = vcmp.eq.s32.totalorder %v211, %v196
        %vm313 = vcmp.eq.s32.totalorder %v214, %v193
        %vm314 = vcmp.eq.s32.totalorder %v214, %v194
        %vm315 = vcmp.eq.s32.totalorder %v214, %v195
        %vm316 = vcmp.eq.s32.totalorder %v214, %v196
        %vm317 = vcmp.eq.s32.totalorder %v217, %v193
        %vm318 = vcmp.eq.s32.totalorder %v217, %v194
        %vm319 = vcmp.eq.s32.totalorder %v217, %v195
        %vm320 = vcmp.eq.s32.totalorder %v217, %v196
        %vm321 = vcmp.eq.s32.totalorder %v220, %v193
        %vm322 = vcmp.eq.s32.totalorder %v220, %v194
        %vm323 = vcmp.eq.s32.totalorder %v220, %v195
        %vm324 = vcmp.eq.s32.totalorder %v220, %v196
        %vm325 = vcmp.eq.s32.totalorder %v223, %v193
        %vm326 = vcmp.eq.s32.totalorder %v223, %v194
        %vm327 = vcmp.eq.s32.totalorder %v223, %v195
        %vm328 = vcmp.eq.s32.totalorder %v223, %v196
        %vm329 = vcmp.eq.s32.totalorder %v226, %v193
        %vm330 = vcmp.eq.s32.totalorder %v226, %v194
        %vm331 = vcmp.eq.s32.totalorder %v226, %v195
        %vm332 = vcmp.eq.s32.totalorder %v226, %v196
        %vm333 = vcmp.eq.s32.totalorder %v229, %v193
        %vm334 = vcmp.eq.s32.totalorder %v229, %v194
        %vm335 = vcmp.eq.s32.totalorder %v229, %v195
        %vm336 = vcmp.eq.s32.totalorder %v229, %v196
        %vm337 = vcmp.eq.s32.totalorder %v232, %v193
        %vm338 = vcmp.eq.s32.totalorder %v232, %v194
        %vm339 = vcmp.eq.s32.totalorder %v232, %v195
        %vm340 = vcmp.eq.s32.totalorder %v232, %v196
        %vm341 = vcmp.eq.s32.totalorder %v235, %v193
        %vm342 = vcmp.eq.s32.totalorder %v235, %v194
        %vm343 = vcmp.eq.s32.totalorder %v235, %v195
        %vm344 = vcmp.eq.s32.totalorder %v235, %v196
        %vm345 = vcmp.eq.s32.totalorder %v238, %v193
        %vm346 = vcmp.eq.s32.totalorder %v238, %v194
        %vm347 = vcmp.eq.s32.totalorder %v238, %v195
        %vm348 = vcmp.eq.s32.totalorder %v238, %v196
        %vm349 = vcmp.eq.s32.totalorder %v241, %v193
        %vm350 = vcmp.eq.s32.totalorder %v241, %v194
        %vm351 = vcmp.eq.s32.totalorder %v241, %v195
        %vm352 = vcmp.eq.s32.totalorder %v241, %v196
        %vm353 = vcmp.eq.s32.totalorder %v244, %v193
        %vm354 = vcmp.eq.s32.totalorder %v244, %v194
        %vm355 = vcmp.eq.s32.totalorder %v244, %v195
        %vm356 = vcmp.eq.s32.totalorder %v244, %v196
        %vm357 = vcmp.eq.s32.totalorder %v247, %v193
        %vm358 = vcmp.eq.s32.totalorder %v247, %v194
        %vm359 = vcmp.eq.s32.totalorder %v247, %v195
        %vm360 = vcmp.eq.s32.totalorder %v247, %v196
        %vm361 = vcmp.eq.s32.totalorder %v250, %v193
        %vm362 = vcmp.eq.s32.totalorder %v250, %v194
        %vm363 = vcmp.eq.s32.totalorder %v250, %v195
        %vm364 = vcmp.eq.s32.totalorder %v250, %v196
        %vm365 = vcmp.eq.s32.totalorder %v253, %v193
        %vm366 = vcmp.eq.s32.totalorder %v253, %v194
        %vm367 = vcmp.eq.s32.totalorder %v253, %v195
        %vm368 = vcmp.eq.s32.totalorder %v253, %v196
        %vm369 = vcmp.eq.s32.totalorder %v256, %v193
        %vm370 = vcmp.eq.s32.totalorder %v256, %v194
        %vm371 = vcmp.eq.s32.totalorder %v256, %v195
        %vm372 = vcmp.eq.s32.totalorder %v256, %v196
        %vm373 = vcmp.eq.s32.totalorder %v259, %v193
        %vm374 = vcmp.eq.s32.totalorder %v259, %v194
        %vm375 = vcmp.eq.s32.totalorder %v259, %v195
        %vm376 = vcmp.eq.s32.totalorder %v259, %v196
        %vm377 = vcmp.eq.s32.totalorder %v262, %v193
        %vm378 = vcmp.eq.s32.totalorder %v262, %v194
        %vm379 = vcmp.eq.s32.totalorder %v262, %v195
        %vm380 = vcmp.eq.s32.totalorder %v262, %v196
        %vm381 = vcmp.eq.s32.totalorder %v265, %v193
        %vm382 = vcmp.eq.s32.totalorder %v265, %v194
        %vm383 = vcmp.eq.s32.totalorder %v265, %v195
        %vm384 = vcmp.eq.s32.totalorder %v265, %v196
        %vm385 = vcmp.eq.s32.totalorder %v268, %v193
        %vm386 = vcmp.eq.s32.totalorder %v268, %v194
        %vm387 = vcmp.eq.s32.totalorder %v268, %v195
        %vm388 = vcmp.eq.s32.totalorder %v268, %v196
        %vm389 = vcmp.eq.s32.totalorder %v271, %v193
        %vm390 = vcmp.eq.s32.totalorder %v271, %v194
        %vm391 = vcmp.eq.s32.totalorder %v271, %v195
        %vm392 = vcmp.eq.s32.totalorder %v271, %v196
        %vm393 = vcmp.eq.s32.totalorder %v274, %v193
        %vm394 = vcmp.eq.s32.totalorder %v274, %v194
        %vm395 = vcmp.eq.s32.totalorder %v274, %v195
        %vm396 = vcmp.eq.s32.totalorder %v274, %v196
        %vm397 = vcmp.eq.s32.totalorder %v277, %v193
        %vm398 = vcmp.eq.s32.totalorder %v277, %v194
        %vm399 = vcmp.eq.s32.totalorder %v277, %v195
        %vm400 = vcmp.eq.s32.totalorder %v277, %v196
        %vm401 = vcmp.eq.s32.totalorder %v280, %v193
        %vm402 = vcmp.eq.s32.totalorder %v280, %v194
        %vm403 = vcmp.eq.s32.totalorder %v280, %v195
        %vm404 = vcmp.eq.s32.totalorder %v280, %v196
        %vm405 = vcmp.eq.s32.totalorder %v283, %v193
        %vm406 = vcmp.eq.s32.totalorder %v283, %v194
        %vm407 = vcmp.eq.s32.totalorder %v283, %v195
        %vm408 = vcmp.eq.s32.totalorder %v283, %v196
        %vm409 = vcmp.eq.s32.totalorder %v286, %v193
        %vm410 = vcmp.eq.s32.totalorder %v286, %v194
        %vm411 = vcmp.eq.s32.totalorder %v286, %v195
        %vm412 = vcmp.eq.s32.totalorder %v286, %v196
        %vm413 = vcmp.eq.s32.totalorder %v289, %v193
        %vm414 = vcmp.eq.s32.totalorder %v289, %v194
        %vm415 = vcmp.eq.s32.totalorder %v289, %v195
        %vm416 = vcmp.eq.s32.totalorder %v289, %v196
        %vm417 = vcmp.eq.s32.totalorder %v292, %v193
        %vm418 = vcmp.eq.s32.totalorder %v292, %v194
        %vm419 = vcmp.eq.s32.totalorder %v292, %v195
        %vm420 = vcmp.eq.s32.totalorder %v292, %v196
        %v421 = vsel %vm293, 1.0, 0.0
        %v422 = vsel %vm294, 1.0, 0.0
        %v423 = vsel %vm295, 1.0, 0.0
        %v424 = vsel %vm296, 1.0, 0.0
        %v425 = vsel %vm297, 1.0, 0.0
        %v426 = vsel %vm298, 1.0, 0.0
        %v427 = vsel %vm299, 1.0, 0.0
        %v428 = vsel %vm300, 1.0, 0.0
        %v429 = vsel %vm301, 1.0, 0.0
        %v430 = vsel %vm302, 1.0, 0.0
        %v431 = vsel %vm303, 1.0, 0.0
        %v432 = vsel %vm304, 1.0, 0.0
        %v433 = vsel %vm305, 1.0, 0.0
        %v434 = vsel %vm306, 1.0, 0.0
        %v435 = vsel %vm307, 1.0, 0.0
        %v436 = vsel %vm308, 1.0, 0.0
        %v437 = vsel %vm309, 1.0, 0.0
        %v438 = vsel %vm310, 1.0, 0.0
        %v439 = vsel %vm311, 1.0, 0.0
        %v440 = vsel %vm312, 1.0, 0.0
        %v441 = vsel %vm313, 1.0, 0.0
        %v442 = vsel %vm314, 1.0, 0.0
        %v443 = vsel %vm315, 1.0, 0.0
        %v444 = vsel %vm316, 1.0, 0.0
        %v445 = vsel %vm317, 1.0, 0.0
        %v446 = vsel %vm318, 1.0, 0.0
        %v447 = vsel %vm319, 1.0, 0.0
        %v448 = vsel %vm320, 1.0, 0.0
        %v449 = vsel %vm321, 1.0, 0.0
        %v450 = vsel %vm322, 1.0, 0.0
        %v451 = vsel %vm323, 1.0, 0.0
        %v452 = vsel %vm324, 1.0, 0.0
        %v453 = vsel %vm325, 1.0, 0.0
        %v454 = vsel %vm326, 1.0, 0.0
        %v455 = vsel %vm327, 1.0, 0.0
        %v456 = vsel %vm328, 1.0, 0.0
        %v457 = vsel %vm329, 1.0, 0.0
        %v458 = vsel %vm330, 1.0, 0.0
        %v459 = vsel %vm331, 1.0, 0.0
        %v460 = vsel %vm332, 1.0, 0.0
        %v461 = vsel %vm333, 1.0, 0.0
        %v462 = vsel %vm334, 1.0, 0.0
        %v463 = vsel %vm335, 1.0, 0.0
        %v464 = vsel %vm336, 1.0, 0.0
        %v465 = vsel %vm337, 1.0, 0.0
        %v466 = vsel %vm338, 1.0, 0.0
        %v467 = vsel %vm339, 1.0, 0.0
        %v468 = vsel %vm340, 1.0, 0.0
        %v469 = vsel %vm341, 1.0, 0.0
        %v470 = vsel %vm342, 1.0, 0.0
        %v471 = vsel %vm343, 1.0, 0.0
        %v472 = vsel %vm344, 1.0, 0.0
        %v473 = vsel %vm345, 1.0, 0.0
        %v474 = vsel %vm346, 1.0, 0.0
        %v475 = vsel %vm347, 1.0, 0.0
        %v476 = vsel %vm348, 1.0, 0.0
        %v477 = vsel %vm349, 1.0, 0.0
        %v478 = vsel %vm350, 1.0, 0.0
        %v479 = vsel %vm351, 1.0, 0.0
        %v480 = vsel %vm352, 1.0, 0.0
        %v481 = vsel %vm353, 1.0, 0.0
        %v482 = vsel %vm354, 1.0, 0.0
        %v483 = vsel %vm355, 1.0, 0.0
        %v484 = vsel %vm356, 1.0, 0.0
        %v485 = vsel %vm357, 1.0, 0.0
        %v486 = vsel %vm358, 1.0, 0.0
        %v487 = vsel %vm359, 1.0, 0.0
        %v488 = vsel %vm360, 1.0, 0.0
        %v489 = vsel %vm361, 1.0, 0.0
        %v490 = vsel %vm362, 1.0, 0.0
        %v491 = vsel %vm363, 1.0, 0.0
        %v492 = vsel %vm364, 1.0, 0.0
        %v493 = vsel %vm365, 1.0, 0.0
        %v494 = vsel %vm366, 1.0, 0.0
        %v495 = vsel %vm367, 1.0, 0.0
        %v496 = vsel %vm368, 1.0, 0.0
        %v497 = vsel %vm369, 1.0, 0.0
        %v498 = vsel %vm370, 1.0, 0.0
        %v499 = vsel %vm371, 1.0, 0.0
        %v500 = vsel %vm372, 1.0, 0.0
        %v501 = vsel %vm373, 1.0, 0.0
        %v502 = vsel %vm374, 1.0, 0.0
        %v503 = vsel %vm375, 1.0, 0.0
        %v504 = vsel %vm376, 1.0, 0.0
        %v505 = vsel %vm377, 1.0, 0.0
        %v506 = vsel %vm378, 1.0, 0.0
        %v507 = vsel %vm379, 1.0, 0.0
        %v508 = vsel %vm380, 1.0, 0.0
        %v509 = vsel %vm381, 1.0, 0.0
        %v510 = vsel %vm382, 1.0, 0.0
        %v511 = vsel %vm383, 1.0, 0.0
        %v512 = vsel %vm384, 1.0, 0.0
        %v513 = vsel %vm385, 1.0, 0.0
        %v514 = vsel %vm386, 1.0, 0.0
        %v515 = vsel %vm387, 1.0, 0.0
        %v516 = vsel %vm388, 1.0, 0.0
        %v517 = vsel %vm389, 1.0, 0.0
        %v518 = vsel %vm390, 1.0, 0.0
        %v519 = vsel %vm391, 1.0, 0.0
        %v520 = vsel %vm392, 1.0, 0.0
        %v521 = vsel %vm393, 1.0, 0.0
        %v522 = vsel %vm394, 1.0, 0.0
        %v523 = vsel %vm395, 1.0, 0.0
        %v524 = vsel %vm396, 1.0, 0.0
        %v525 = vsel %vm397, 1.0, 0.0
        %v526 = vsel %vm398, 1.0, 0.0
        %v527 = vsel %vm399, 1.0, 0.0
        %v528 = vsel %vm400, 1.0, 0.0
        %v529 = vsel %vm401, 1.0, 0.0
        %v530 = vsel %vm402, 1.0, 0.0
        %v531 = vsel %vm403, 1.0, 0.0
        %v532 = vsel %vm404, 1.0, 0.0
        %v533 = vsel %vm405, 1.0, 0.0
        %v534 = vsel %vm406, 1.0, 0.0
        %v535 = vsel %vm407, 1.0, 0.0
        %v536 = vsel %vm408, 1.0, 0.0
        %v537 = vsel %vm409, 1.0, 0.0
        %v538 = vsel %vm410, 1.0, 0.0
        %v539 = vsel %vm411, 1.0, 0.0
        %v540 = vsel %vm412, 1.0, 0.0
        %v541 = vsel %vm413, 1.0, 0.0
        %v542 = vsel %vm414, 1.0, 0.0
        %v543 = vsel %vm415, 1.0, 0.0
        %v544 = vsel %vm416, 1.0, 0.0
        %v545 = vsel %vm417, 1.0, 0.0
        %v546 = vsel %vm418, 1.0, 0.0
        %v547 = vsel %vm419, 1.0, 0.0
        %v548 = vsel %vm420, 1.0, 0.0
        %v549 = vpack.c.bf16 %v425, %v421
        %v550 = vpack.c.bf16 %v426, %v422
        %v551 = vpack.c.bf16 %v427, %v423
        %v552 = vpack.c.bf16 %v428, %v424
        %v553 = vpack.c.bf16 %v433, %v429
        %v554 = vpack.c.bf16 %v434, %v430
        %v555 = vpack.c.bf16 %v435, %v431
        %v556 = vpack.c.bf16 %v436, %v432
        %v557 = vpack.c.bf16 %v441, %v437
        %v558 = vpack.c.bf16 %v442, %v438
        %v559 = vpack.c.bf16 %v443, %v439
        %v560 = vpack.c.bf16 %v444, %v440
        %v561 = vpack.c.bf16 %v449, %v445
        %v562 = vpack.c.bf16 %v450, %v446
        %v563 = vpack.c.bf16 %v451, %v447
        %v564 = vpack.c.bf16 %v452, %v448
        %v565 = vpack.c.bf16 %v457, %v453
        %v566 = vpack.c.bf16 %v458, %v454
        %v567 = vpack.c.bf16 %v459, %v455
        %v568 = vpack.c.bf16 %v460, %v456
        %v569 = vpack.c.bf16 %v465, %v461
        %v570 = vpack.c.bf16 %v466, %v462
        %v571 = vpack.c.bf16 %v467, %v463
        %v572 = vpack.c.bf16 %v468, %v464
        %v573 = vpack.c.bf16 %v473, %v469
        %v574 = vpack.c.bf16 %v474, %v470
        %v575 = vpack.c.bf16 %v475, %v471
        %v576 = vpack.c.bf16 %v476, %v472
        %v577 = vpack.c.bf16 %v481, %v477
        %v578 = vpack.c.bf16 %v482, %v478
        %v579 = vpack.c.bf16 %v483, %v479
        %v580 = vpack.c.bf16 %v484, %v480
        %v581 = vpack.c.bf16 %v489, %v485
        %v582 = vpack.c.bf16 %v490, %v486
        %v583 = vpack.c.bf16 %v491, %v487
        %v584 = vpack.c.bf16 %v492, %v488
        %v585 = vpack.c.bf16 %v497, %v493
        %v586 = vpack.c.bf16 %v498, %v494
        %v587 = vpack.c.bf16 %v499, %v495
        %v588 = vpack.c.bf16 %v500, %v496
        %v589 = vpack.c.bf16 %v505, %v501
        %v590 = vpack.c.bf16 %v506, %v502
        %v591 = vpack.c.bf16 %v507, %v503
        %v592 = vpack.c.bf16 %v508, %v504
        %v593 = vpack.c.bf16 %v513, %v509
        %v594 = vpack.c.bf16 %v514, %v510
        %v595 = vpack.c.bf16 %v515, %v511
        %v596 = vpack.c.bf16 %v516, %v512
        %v597 = vpack.c.bf16 %v521, %v517
        %v598 = vpack.c.bf16 %v522, %v518
        %v599 = vpack.c.bf16 %v523, %v519
        %v600 = vpack.c.bf16 %v524, %v520
        %v601 = vpack.c.bf16 %v529, %v525
        %v602 = vpack.c.bf16 %v530, %v526
        %v603 = vpack.c.bf16 %v531, %v527
        %v604 = vpack.c.bf16 %v532, %v528
        %v605 = vpack.c.bf16 %v537, %v533
        %v606 = vpack.c.bf16 %v538, %v534
        %v607 = vpack.c.bf16 %v539, %v535
        %v608 = vpack.c.bf16 %v540, %v536
        %v609 = vpack.c.bf16 %v545, %v541
        %v610 = vpack.c.bf16 %v546, %v542
        %v611 = vpack.c.bf16 %v547, %v543
        %v612 = vpack.c.bf16 %v548, %v544
        %v613 = vld [vmem:[#allocation2] sm:$0xff]
        %v614 = vld [vmem:[#allocation2 + $0x8] sm:$0xff]
        %v615 = vld [vmem:[#allocation2 + $0x10] sm:$0xff]
        %v616 = vld [vmem:[#allocation2 + $0x18] sm:$0xff]
        %v617 = vld [vmem:[#allocation2 + $0x20] sm:$0xff]
        %v618 = vld [vmem:[#allocation2 + $0x28] sm:$0xff]
        %v619 = vld [vmem:[#allocation2 + $0x30] sm:$0xff]
        %v620 = vld [vmem:[#allocation2 + $0x38] sm:$0xff]
        %v621 = vld [vmem:[#allocation2 + $0x40] sm:$0xff]
        %v622 = vld [vmem:[#allocation2 + $0x48] sm:$0xff]
        %v623 = vld [vmem:[#allocation2 + $0x50] sm:$0xff]
        %v624 = vld [vmem:[#allocation2 + $0x58] sm:$0xff]
        %v625 = vld [vmem:[#allocation2 + $0x60] sm:$0xff]
        %v626 = vld [vmem:[#allocation2 + $0x68] sm:$0xff]
        %v627 = vld [vmem:[#allocation2 + $0x70] sm:$0xff]
        %v628 = vld [vmem:[#allocation2 + $0x78] sm:$0xff]
        %v629 = vld [vmem:[#allocation2 + $0x80] sm:$0xff]
        %v630 = vld [vmem:[#allocation2 + $0x88] sm:$0xff]
        %v631 = vld [vmem:[#allocation2 + $0x90] sm:$0xff]
        %v632 = vld [vmem:[#allocation2 + $0x98] sm:$0xff]
        %v633 = vld [vmem:[#allocation2 + $0xa0] sm:$0xff]
        %v634 = vld [vmem:[#allocation2 + $0xa8] sm:$0xff]
        %v635 = vld [vmem:[#allocation2 + $0xb0] sm:$0xff]
        %v636 = vld [vmem:[#allocation2 + $0xb8] sm:$0xff]
        %v637 = vld [vmem:[#allocation2 + $0xc0] sm:$0xff]
        %v638 = vld [vmem:[#allocation2 + $0xc8] sm:$0xff]
        %v639 = vld [vmem:[#allocation2 + $0xd0] sm:$0xff]
        %v640 = vld [vmem:[#allocation2 + $0xd8] sm:$0xff]
        %v641 = vld [vmem:[#allocation2 + $0xe0] sm:$0xff]
        %v642 = vld [vmem:[#allocation2 + $0xe8] sm:$0xff]
        %v643 = vld [vmem:[#allocation2 + $0xf0] sm:$0xff]
        %v644 = vld [vmem:[#allocation2 + $0xf8] sm:$0xff]
        %v645 = vld [vmem:[#allocation2 + $0x100] sm:$0xff]
        %v646 = vld [vmem:[#allocation2 + $0x108] sm:$0xff]
        %v647 = vld [vmem:[#allocation2 + $0x110] sm:$0xff]
        %v648 = vld [vmem:[#allocation2 + $0x118] sm:$0xff]
        %v649 = vld [vmem:[#allocation2 + $0x120] sm:$0xff]
        %v650 = vld [vmem:[#allocation2 + $0x128] sm:$0xff]
        %v651 = vld [vmem:[#allocation2 + $0x130] sm:$0xff]
        %v652 = vld [vmem:[#allocation2 + $0x138] sm:$0xff]
        %v653 = vld [vmem:[#allocation2 + $0x140] sm:$0xff]
        %v654 = vld [vmem:[#allocation2 + $0x148] sm:$0xff]
        %v655 = vld [vmem:[#allocation2 + $0x150] sm:$0xff]
        %v656 = vld [vmem:[#allocation2 + $0x158] sm:$0xff]
        %v657 = vld [vmem:[#allocation2 + $0x160] sm:$0xff]
        %v658 = vld [vmem:[#allocation2 + $0x168] sm:$0xff]
        %v659 = vld [vmem:[#allocation2 + $0x170] sm:$0xff]
        %v660 = vld [vmem:[#allocation2 + $0x178] sm:$0xff]
        %v661 = vld [vmem:[#allocation2 + $0x180] sm:$0xff]
        %v662 = vld [vmem:[#allocation2 + $0x188] sm:$0xff]
        %v663 = vld [vmem:[#allocation2 + $0x190] sm:$0xff]
        %v664 = vld [vmem:[#allocation2 + $0x198] sm:$0xff]
        %v665 = vld [vmem:[#allocation2 + $0x1a0] sm:$0xff]
        %v666 = vld [vmem:[#allocation2 + $0x1a8] sm:$0xff]
        %v667 = vld [vmem:[#allocation2 + $0x1b0] sm:$0xff]
        %v668 = vld [vmem:[#allocation2 + $0x1b8] sm:$0xff]
        %v669 = vld [vmem:[#allocation2 + $0x1c0] sm:$0xff]
        %v670 = vld [vmem:[#allocation2 + $0x1c8] sm:$0xff]
        %v671 = vld [vmem:[#allocation2 + $0x1d0] sm:$0xff]
        %v672 = vld [vmem:[#allocation2 + $0x1d8] sm:$0xff]
        %v673 = vld [vmem:[#allocation2 + $0x1e0] sm:$0xff]
        %v674 = vld [vmem:[#allocation2 + $0x1e8] sm:$0xff]
        %v675 = vld [vmem:[#allocation2 + $0x1f0] sm:$0xff]
        %v676 = vld [vmem:[#allocation2 + $0x1f8] sm:$0xff]
        %v677 = vld [vmem:[#allocation2 + $0x200] sm:$0xff]
        %v678 = vld [vmem:[#allocation2 + $0x208] sm:$0xff]
        %v679 = vld [vmem:[#allocation2 + $0x210] sm:$0xff]
        %v680 = vld [vmem:[#allocation2 + $0x218] sm:$0xff]
        %v681 = vld [vmem:[#allocation2 + $0x220] sm:$0xff]
        %v682 = vld [vmem:[#allocation2 + $0x228] sm:$0xff]
        %v683 = vld [vmem:[#allocation2 + $0x230] sm:$0xff]
        %v684 = vld [vmem:[#allocation2 + $0x238] sm:$0xff]
        %v685 = vld [vmem:[#allocation2 + $0x240] sm:$0xff]
        %v686 = vld [vmem:[#allocation2 + $0x248] sm:$0xff]
        %v687 = vld [vmem:[#allocation2 + $0x250] sm:$0xff]
        %v688 = vld [vmem:[#allocation2 + $0x258] sm:$0xff]
        %v689 = vld [vmem:[#allocation2 + $0x260] sm:$0xff]
        %v690 = vld [vmem:[#allocation2 + $0x268] sm:$0xff]
        %v691 = vld [vmem:[#allocation2 + $0x270] sm:$0xff]
        %v692 = vld [vmem:[#allocation2 + $0x278] sm:$0xff]
        %v693 = vld [vmem:[#allocation2 + $0x280] sm:$0xff]
        %v694 = vld [vmem:[#allocation2 + $0x288] sm:$0xff]
        %v695 = vld [vmem:[#allocation2 + $0x290] sm:$0xff]
        %v696 = vld [vmem:[#allocation2 + $0x298] sm:$0xff]
        %v697 = vld [vmem:[#allocation2 + $0x2a0] sm:$0xff]
        %v698 = vld [vmem:[#allocation2 + $0x2a8] sm:$0xff]
        %v699 = vld [vmem:[#allocation2 + $0x2b0] sm:$0xff]
        %v700 = vld [vmem:[#allocation2 + $0x2b8] sm:$0xff]
        %v701 = vld [vmem:[#allocation2 + $0x2c0] sm:$0xff]
        %v702 = vld [vmem:[#allocation2 + $0x2c8] sm:$0xff]
        %v703 = vld [vmem:[#allocation2 + $0x2d0] sm:$0xff]
        %v704 = vld [vmem:[#allocation2 + $0x2d8] sm:$0xff]
        %v705 = vld [vmem:[#allocation2 + $0x2e0] sm:$0xff]
        %v706 = vld [vmem:[#allocation2 + $0x2e8] sm:$0xff]
        %v707 = vld [vmem:[#allocation2 + $0x2f0] sm:$0xff]
        %v708 = vld [vmem:[#allocation2 + $0x2f8] sm:$0xff]
        %v709 = vld [vmem:[#allocation2 + $0x300] sm:$0xff]
        %v710 = vld [vmem:[#allocation2 + $0x308] sm:$0xff]
        %v711 = vld [vmem:[#allocation2 + $0x310] sm:$0xff]
        %v712 = vld [vmem:[#allocation2 + $0x318] sm:$0xff]
        %v713 = vld [vmem:[#allocation2 + $0x320] sm:$0xff]
        %v714 = vld [vmem:[#allocation2 + $0x328] sm:$0xff]
        %v715 = vld [vmem:[#allocation2 + $0x330] sm:$0xff]
        %v716 = vld [vmem:[#allocation2 + $0x338] sm:$0xff]
        %v717 = vld [vmem:[#allocation2 + $0x340] sm:$0xff]
        %v718 = vld [vmem:[#allocation2 + $0x348] sm:$0xff]
        %v719 = vld [vmem:[#allocation2 + $0x350] sm:$0xff]
        %v720 = vld [vmem:[#allocation2 + $0x358] sm:$0xff]
        %v721 = vld [vmem:[#allocation2 + $0x360] sm:$0xff]
        %v722 = vld [vmem:[#allocation2 + $0x368] sm:$0xff]
        %v723 = vld [vmem:[#allocation2 + $0x370] sm:$0xff]
        %v724 = vld [vmem:[#allocation2 + $0x378] sm:$0xff]
        %v725 = vld [vmem:[#allocation2 + $0x380] sm:$0xff]
        %v726 = vld [vmem:[#allocation2 + $0x388] sm:$0xff]
        %v727 = vld [vmem:[#allocation2 + $0x390] sm:$0xff]
        %v728 = vld [vmem:[#allocation2 + $0x398] sm:$0xff]
        %v729 = vld [vmem:[#allocation2 + $0x3a0] sm:$0xff]
        %v730 = vld [vmem:[#allocation2 + $0x3a8] sm:$0xff]
        %v731 = vld [vmem:[#allocation2 + $0x3b0] sm:$0xff]
        %v732 = vld [vmem:[#allocation2 + $0x3b8] sm:$0xff]
        %v733 = vld [vmem:[#allocation2 + $0x3c0] sm:$0xff]
        %v734 = vld [vmem:[#allocation2 + $0x3c8] sm:$0xff]
        %v735 = vld [vmem:[#allocation2 + $0x3d0] sm:$0xff]
        %v736 = vld [vmem:[#allocation2 + $0x3d8] sm:$0xff]
        %v737 = vld [vmem:[#allocation2 + $0x3e0] sm:$0xff]
        %v738 = vld [vmem:[#allocation2 + $0x3e8] sm:$0xff]
        %v739 = vld [vmem:[#allocation2 + $0x3f0] sm:$0xff]
        %v740 = vld [vmem:[#allocation2 + $0x3f8] sm:$0xff]
        %v741 = vpack.c.bf16 %v615, %v613
        %v742 = vpack.c.bf16 %v616, %v614
        %v743 = vpack.c.bf16 %v619, %v617
        %v744 = vpack.c.bf16 %v620, %v618
        %v745 = vpack.c.bf16 %v623, %v621
        %v746 = vpack.c.bf16 %v624, %v622
        %v747 = vpack.c.bf16 %v627, %v625
        %v748 = vpack.c.bf16 %v628, %v626
        %v749 = vpack.c.bf16 %v631, %v629
        %v750 = vpack.c.bf16 %v632, %v630
        %v751 = vpack.c.bf16 %v635, %v633
        %v752 = vpack.c.bf16 %v636, %v634
        %v753 = vpack.c.bf16 %v639, %v637
        %v754 = vpack.c.bf16 %v640, %v638
        %v755 = vpack.c.bf16 %v643, %v641
        %v756 = vpack.c.bf16 %v644, %v642
        %v757 = vpack.c.bf16 %v647, %v645
        %v758 = vpack.c.bf16 %v648, %v646
        %v759 = vpack.c.bf16 %v651, %v649
        %v760 = vpack.c.bf16 %v652, %v650
        %v761 = vpack.c.bf16 %v655, %v653
        %v762 = vpack.c.bf16 %v656, %v654
        %v763 = vpack.c.bf16 %v659, %v657
        %v764 = vpack.c.bf16 %v660, %v658
        %v765 = vpack.c.bf16 %v663, %v661
        %v766 = vpack.c.bf16 %v664, %v662
        %v767 = vpack.c.bf16 %v667, %v665
        %v768 = vpack.c.bf16 %v668, %v666
        %v769 = vpack.c.bf16 %v671, %v669
        %v770 = vpack.c.bf16 %v672, %v670
        %v771 = vpack.c.bf16 %v675, %v673
        %v772 = vpack.c.bf16 %v676, %v674
        %v773 = vpack.c.bf16 %v679, %v677
        %v774 = vpack.c.bf16 %v680, %v678
        %v775 = vpack.c.bf16 %v683, %v681
        %v776 = vpack.c.bf16 %v684, %v682
        %v777 = vpack.c.bf16 %v687, %v685
        %v778 = vpack.c.bf16 %v688, %v686
        %v779 = vpack.c.bf16 %v691, %v689
        %v780 = vpack.c.bf16 %v692, %v690
        %v781 = vpack.c.bf16 %v695, %v693
        %v782 = vpack.c.bf16 %v696, %v694
        %v783 = vpack.c.bf16 %v699, %v697
        %v784 = vpack.c.bf16 %v700, %v698
        %v785 = vpack.c.bf16 %v703, %v701
        %v786 = vpack.c.bf16 %v704, %v702
        %v787 = vpack.c.bf16 %v707, %v705
        %v788 = vpack.c.bf16 %v708, %v706
        %v789 = vpack.c.bf16 %v711, %v709
        %v790 = vpack.c.bf16 %v712, %v710
        %v791 = vpack.c.bf16 %v715, %v713
        %v792 = vpack.c.bf16 %v716, %v714
        %v793 = vpack.c.bf16 %v719, %v717
        %v794 = vpack.c.bf16 %v720, %v718
        %v795 = vpack.c.bf16 %v723, %v721
        %v796 = vpack.c.bf16 %v724, %v722
        %v797 = vpack.c.bf16 %v727, %v725
        %v798 = vpack.c.bf16 %v728, %v726
        %v799 = vpack.c.bf16 %v731, %v729
        %v800 = vpack.c.bf16 %v732, %v730
        %v801 = vpack.c.bf16 %v735, %v733
        %v802 = vpack.c.bf16 %v736, %v734
        %v803 = vpack.c.bf16 %v739, %v737
        %v804 = vpack.c.bf16 %v740, %v738
        %805 = vmatprep.subr.bf16.mxu0 %v756
        %806 = vmatpush1.bf16.msra.mxu0 %v755
        %807 = vmatprep.subr.bf16.mxu0 %v754
        %808 = vmatpush1.bf16.msra.mxu0 %v753
        %809 = vmatprep.subr.bf16.mxu0 %v752
        %810 = vmatpush1.bf16.msra.mxu0 %v751
        %811 = vmatprep.subr.bf16.mxu0 %v750
        %812 = vmatpush1.bf16.msra.mxu0 %v749
        %813 = vmatprep.subr.bf16.mxu0 %v748
        %814 = vmatpush1.bf16.msra.mxu0 %v747
        %815 = vmatprep.subr.bf16.mxu0 %v746
        %816 = vmatpush1.bf16.msra.mxu0 %v745
        %817 = vmatprep.subr.bf16.mxu0 %v744
        %818 = vmatpush1.bf16.msra.mxu0 %v743
        %819 = vmatprep.subr.bf16.mxu0 %v742
        %820 = vmatpush1.bf16.msra.mxu0 %v741
        %821 = vmatprep.subr.bf16.mxu0 %v772
        %822 = vmatpush2.bf16.msra.mxu0 %v771
        %823 = vmatprep.subr.bf16.mxu0 %v770
        %824 = vmatpush2.bf16.msra.mxu0 %v769
        %825 = vmatprep.subr.bf16.mxu0 %v768
        %826 = vmatpush2.bf16.msra.mxu0 %v767
        %827 = vmatprep.subr.bf16.mxu0 %v766
        %828 = vmatpush2.bf16.msra.mxu0 %v765
        %829 = vmatprep.subr.bf16.mxu0 %v764
        %830 = vmatpush2.bf16.msra.mxu0 %v763
        %831 = vmatprep.subr.bf16.mxu0 %v762
        %832 = vmatpush2.bf16.msra.mxu0 %v761
        %833 = vmatprep.subr.bf16.mxu0 %v760
        %834 = vmatpush2.bf16.msra.mxu0 %v759
        %835 = vmatprep.subr.bf16.mxu0 %v758
        %836 = vmatpush2.bf16.msra.mxu0 %v757
        %837 = vmatprep.mubr.bf16.mxu0 %v550
        %838 = vmatmul.mubr.bf16.gmra.mxu0 %v549
        %v839 = vpop.f32.mrf.mxu0
        %v840 = vadd.f32 0.0, %v839
        %v841 = vpop.f32.mrf.mxu0
        %v842 = vadd.f32 0.0, %v841
        %v843 = vpop.f32.mrf.mxu0
        %v844 = vadd.f32 0.0, %v843
        %v845 = vpop.f32.mrf.mxu0
        %v846 = vadd.f32 0.0, %v845
        %847 = vmatprep.mubr.bf16.mxu0 %v554
        %848 = vmatmul.mubr.bf16.gmra.mxu0 %v553
        %v849 = vpop.f32.mrf.mxu0
        %v850 = vadd.f32 0.0, %v849
        %v851 = vpop.f32.mrf.mxu0
        %v852 = vadd.f32 0.0, %v851
        %v853 = vpop.f32.mrf.mxu0
        %v854 = vadd.f32 0.0, %v853
        %v855 = vpop.f32.mrf.mxu0
        %v856 = vadd.f32 0.0, %v855
        %857 = vmatprep.mubr.bf16.mxu0 %v558
        %858 = vmatmul.mubr.bf16.gmra.mxu0 %v557
        %v859 = vpop.f32.mrf.mxu0
        %v860 = vadd.f32 0.0, %v859
        %v861 = vpop.f32.mrf.mxu0
        %v862 = vadd.f32 0.0, %v861
        %v863 = vpop.f32.mrf.mxu0
        %v864 = vadd.f32 0.0, %v863
        %v865 = vpop.f32.mrf.mxu0
        %v866 = vadd.f32 0.0, %v865
        %867 = vmatprep.mubr.bf16.mxu0 %v562
        %868 = vmatmul.mubr.bf16.gmra.mxu0 %v561
        %v869 = vpop.f32.mrf.mxu0
        %v870 = vadd.f32 0.0, %v869
        %v871 = vpop.f32.mrf.mxu0
        %v872 = vadd.f32 0.0, %v871
        %v873 = vpop.f32.mrf.mxu0
        %v874 = vadd.f32 0.0, %v873
        %v875 = vpop.f32.mrf.mxu0
        %v876 = vadd.f32 0.0, %v875
        %877 = vmatprep.mubr.bf16.mxu0 %v566
        %878 = vmatmul.mubr.bf16.gmra.mxu0 %v565
        %v879 = vpop.f32.mrf.mxu0
        %v880 = vadd.f32 0.0, %v879
        %v881 = vpop.f32.mrf.mxu0
        %v882 = vadd.f32 0.0, %v881
        %v883 = vpop.f32.mrf.mxu0
        %v884 = vadd.f32 0.0, %v883
        %v885 = vpop.f32.mrf.mxu0
        %v886 = vadd.f32 0.0, %v885
        %887 = vmatprep.mubr.bf16.mxu0 %v570
        %888 = vmatmul.mubr.bf16.gmra.mxu0 %v569
        %v889 = vpop.f32.mrf.mxu0
        %v890 = vadd.f32 0.0, %v889
        %v891 = vpop.f32.mrf.mxu0
        %v892 = vadd.f32 0.0, %v891
        %v893 = vpop.f32.mrf.mxu0
        %v894 = vadd.f32 0.0, %v893
        %v895 = vpop.f32.mrf.mxu0
        %v896 = vadd.f32 0.0, %v895
        %897 = vmatprep.mubr.bf16.mxu0 %v574
        %898 = vmatmul.mubr.bf16.gmra.mxu0 %v573
        %v899 = vpop.f32.mrf.mxu0
        %v900 = vadd.f32 0.0, %v899
        %v901 = vpop.f32.mrf.mxu0
        %v902 = vadd.f32 0.0, %v901
        %v903 = vpop.f32.mrf.mxu0
        %v904 = vadd.f32 0.0, %v903
        %v905 = vpop.f32.mrf.mxu0
        %v906 = vadd.f32 0.0, %v905
        %907 = vmatprep.mubr.bf16.mxu0 %v578
        %908 = vmatmul.mubr.bf16.gmra.mxu0 %v577
        %v909 = vpop.f32.mrf.mxu0
        %v910 = vadd.f32 0.0, %v909
        %v911 = vpop.f32.mrf.mxu0
        %v912 = vadd.f32 0.0, %v911
        %v913 = vpop.f32.mrf.mxu0
        %v914 = vadd.f32 0.0, %v913
        %v915 = vpop.f32.mrf.mxu0
        %v916 = vadd.f32 0.0, %v915
        %917 = vmatprep.mubr.bf16.mxu0 %v582
        %918 = vmatmul.mubr.bf16.gmra.mxu0 %v581
        %v919 = vpop.f32.mrf.mxu0
        %v920 = vadd.f32 0.0, %v919
        %v921 = vpop.f32.mrf.mxu0
        %v922 = vadd.f32 0.0, %v921
        %v923 = vpop.f32.mrf.mxu0
        %v924 = vadd.f32 0.0, %v923
        %v925 = vpop.f32.mrf.mxu0
        %v926 = vadd.f32 0.0, %v925
        %927 = vmatprep.mubr.bf16.mxu0 %v586
        %928 = vmatmul.mubr.bf16.gmra.mxu0 %v585
        %v929 = vpop.f32.mrf.mxu0
        %v930 = vadd.f32 0.0, %v929
        %v931 = vpop.f32.mrf.mxu0
        %v932 = vadd.f32 0.0, %v931
        %v933 = vpop.f32.mrf.mxu0
        %v934 = vadd.f32 0.0, %v933
        %v935 = vpop.f32.mrf.mxu0
        %v936 = vadd.f32 0.0, %v935
        %937 = vmatprep.mubr.bf16.mxu0 %v590
        %938 = vmatmul.mubr.bf16.gmra.mxu0 %v589
        %v939 = vpop.f32.mrf.mxu0
        %v940 = vadd.f32 0.0, %v939
        %v941 = vpop.f32.mrf.mxu0
        %v942 = vadd.f32 0.0, %v941
        %v943 = vpop.f32.mrf.mxu0
        %v944 = vadd.f32 0.0, %v943
        %v945 = vpop.f32.mrf.mxu0
        %v946 = vadd.f32 0.0, %v945
        %947 = vmatprep.mubr.bf16.mxu0 %v594
        %948 = vmatmul.mubr.bf16.gmra.mxu0 %v593
        %v949 = vpop.f32.mrf.mxu0
        %v950 = vadd.f32 0.0, %v949
        %v951 = vpop.f32.mrf.mxu0
        %v952 = vadd.f32 0.0, %v951
        %v953 = vpop.f32.mrf.mxu0
        %v954 = vadd.f32 0.0, %v953
        %v955 = vpop.f32.mrf.mxu0
        %v956 = vadd.f32 0.0, %v955
        %957 = vmatprep.mubr.bf16.mxu0 %v598
        %958 = vmatmul.mubr.bf16.gmra.mxu0 %v597
        %v959 = vpop.f32.mrf.mxu0
        %v960 = vadd.f32 0.0, %v959
        %v961 = vpop.f32.mrf.mxu0
        %v962 = vadd.f32 0.0, %v961
        %v963 = vpop.f32.mrf.mxu0
        %v964 = vadd.f32 0.0, %v963
        %v965 = vpop.f32.mrf.mxu0
        %v966 = vadd.f32 0.0, %v965
        %967 = vmatprep.mubr.bf16.mxu0 %v602
        %968 = vmatmul.mubr.bf16.gmra.mxu0 %v601
        %v969 = vpop.f32.mrf.mxu0
        %v970 = vadd.f32 0.0, %v969
        %v971 = vpop.f32.mrf.mxu0
        %v972 = vadd.f32 0.0, %v971
        %v973 = vpop.f32.mrf.mxu0
        %v974 = vadd.f32 0.0, %v973
        %v975 = vpop.f32.mrf.mxu0
        %v976 = vadd.f32 0.0, %v975
        %977 = vmatprep.mubr.bf16.mxu0 %v606
        %978 = vmatmul.mubr.bf16.gmra.mxu0 %v605
        %v979 = vpop.f32.mrf.mxu0
        %v980 = vadd.f32 0.0, %v979
        %v981 = vpop.f32.mrf.mxu0
        %v982 = vadd.f32 0.0, %v981
        %v983 = vpop.f32.mrf.mxu0
        %v984 = vadd.f32 0.0, %v983
        %v985 = vpop.f32.mrf.mxu0
        %v986 = vadd.f32 0.0, %v985
        %987 = vmatprep.mubr.bf16.mxu0 %v610
        %988 = vmatmul.mubr.bf16.gmra.mxu0 %v609
        %v989 = vpop.f32.mrf.mxu0
        %v990 = vadd.f32 0.0, %v989
        %v991 = vpop.f32.mrf.mxu0
        %v992 = vadd.f32 0.0, %v991
        %v993 = vpop.f32.mrf.mxu0
        %v994 = vadd.f32 0.0, %v993
        %v995 = vpop.f32.mrf.mxu0
        %v996 = vadd.f32 0.0, %v995
        %997 = vdwg.mxu0
        %998 = vmatprep.subr.bf16.mxu0 %v788
        %999 = vmatpush1.bf16.msra.mxu0 %v787
        %1000 = vmatprep.subr.bf16.mxu0 %v786
        %1001 = vmatpush1.bf16.msra.mxu0 %v785
        %1002 = vmatprep.subr.bf16.mxu0 %v784
        %1003 = vmatpush1.bf16.msra.mxu0 %v783
        %1004 = vmatprep.subr.bf16.mxu0 %v782
        %1005 = vmatpush1.bf16.msra.mxu0 %v781
        %1006 = vmatprep.subr.bf16.mxu0 %v780
        %1007 = vmatpush1.bf16.msra.mxu0 %v779
        %1008 = vmatprep.subr.bf16.mxu0 %v778
        %1009 = vmatpush1.bf16.msra.mxu0 %v777
        %1010 = vmatprep.subr.bf16.mxu0 %v776
        %1011 = vmatpush1.bf16.msra.mxu0 %v775
        %1012 = vmatprep.subr.bf16.mxu0 %v774
        %1013 = vmatpush1.bf16.msra.mxu0 %v773
        %1014 = vmatprep.subr.bf16.mxu0 %v804
        %1015 = vmatpush2.bf16.msra.mxu0 %v803
        %1016 = vmatprep.subr.bf16.mxu0 %v802
        %1017 = vmatpush2.bf16.msra.mxu0 %v801
        %1018 = vmatprep.subr.bf16.mxu0 %v800
        %1019 = vmatpush2.bf16.msra.mxu0 %v799
        %1020 = vmatprep.subr.bf16.mxu0 %v798
        %1021 = vmatpush2.bf16.msra.mxu0 %v797
        %1022 = vmatprep.subr.bf16.mxu0 %v796
        %1023 = vmatpush2.bf16.msra.mxu0 %v795
        %1024 = vmatprep.subr.bf16.mxu0 %v794
        %1025 = vmatpush2.bf16.msra.mxu0 %v793
        %1026 = vmatprep.subr.bf16.mxu0 %v792
        %1027 = vmatpush2.bf16.msra.mxu0 %v791
        %1028 = vmatprep.subr.bf16.mxu0 %v790
        %1029 = vmatpush2.bf16.msra.mxu0 %v789
        %1030 = vmatprep.mubr.bf16.mxu0 %v552
        %1031 = vmatmul.mubr.bf16.gmra.mxu0 %v551
        %v1032 = vpop.f32.mrf.mxu0
        %v1033 = vadd.f32 %v840, %v1032
        %v1034 = vpop.f32.mrf.mxu0
        %v1035 = vadd.f32 %v842, %v1034
        %v1036 = vpop.f32.mrf.mxu0
        %v1037 = vadd.f32 %v844, %v1036
        %v1038 = vpop.f32.mrf.mxu0
        %v1039 = vadd.f32 %v846, %v1038
        %1040 = vmatprep.mubr.bf16.mxu0 %v556
        %1041 = vmatmul.mubr.bf16.gmra.mxu0 %v555
        %v1042 = vpop.f32.mrf.mxu0
        %v1043 = vadd.f32 %v850, %v1042
        %v1044 = vpop.f32.mrf.mxu0
        %v1045 = vadd.f32 %v852, %v1044
        %v1046 = vpop.f32.mrf.mxu0
        %v1047 = vadd.f32 %v854, %v1046
        %v1048 = vpop.f32.mrf.mxu0
        %v1049 = vadd.f32 %v856, %v1048
        %1050 = vmatprep.mubr.bf16.mxu0 %v560
        %1051 = vmatmul.mubr.bf16.gmra.mxu0 %v559
        %v1052 = vpop.f32.mrf.mxu0
        %v1053 = vadd.f32 %v860, %v1052
        %v1054 = vpop.f32.mrf.mxu0
        %v1055 = vadd.f32 %v862, %v1054
        %v1056 = vpop.f32.mrf.mxu0
        %v1057 = vadd.f32 %v864, %v1056
        %v1058 = vpop.f32.mrf.mxu0
        %v1059 = vadd.f32 %v866, %v1058
        %1060 = vmatprep.mubr.bf16.mxu0 %v564
        %1061 = vmatmul.mubr.bf16.gmra.mxu0 %v563
        %v1062 = vpop.f32.mrf.mxu0
        %v1063 = vadd.f32 %v870, %v1062
        %v1064 = vpop.f32.mrf.mxu0
        %v1065 = vadd.f32 %v872, %v1064
        %v1066 = vpop.f32.mrf.mxu0
        %v1067 = vadd.f32 %v874, %v1066
        %v1068 = vpop.f32.mrf.mxu0
        %v1069 = vadd.f32 %v876, %v1068
        %1070 = vmatprep.mubr.bf16.mxu0 %v568
        %1071 = vmatmul.mubr.bf16.gmra.mxu0 %v567
        %v1072 = vpop.f32.mrf.mxu0
        %v1073 = vadd.f32 %v880, %v1072
        %v1074 = vpop.f32.mrf.mxu0
        %v1075 = vadd.f32 %v882, %v1074
        %v1076 = vpop.f32.mrf.mxu0
        %v1077 = vadd.f32 %v884, %v1076
        %v1078 = vpop.f32.mrf.mxu0
        %v1079 = vadd.f32 %v886, %v1078
        %1080 = vmatprep.mubr.bf16.mxu0 %v572
        %1081 = vmatmul.mubr.bf16.gmra.mxu0 %v571
        %v1082 = vpop.f32.mrf.mxu0
        %v1083 = vadd.f32 %v890, %v1082
        %v1084 = vpop.f32.mrf.mxu0
        %v1085 = vadd.f32 %v892, %v1084
        %v1086 = vpop.f32.mrf.mxu0
        %v1087 = vadd.f32 %v894, %v1086
        %v1088 = vpop.f32.mrf.mxu0
        %v1089 = vadd.f32 %v896, %v1088
        %1090 = vmatprep.mubr.bf16.mxu0 %v576
        %1091 = vmatmul.mubr.bf16.gmra.mxu0 %v575
        %v1092 = vpop.f32.mrf.mxu0
        %v1093 = vadd.f32 %v900, %v1092
        %v1094 = vpop.f32.mrf.mxu0
        %v1095 = vadd.f32 %v902, %v1094
        %v1096 = vpop.f32.mrf.mxu0
        %v1097 = vadd.f32 %v904, %v1096
        %v1098 = vpop.f32.mrf.mxu0
        %v1099 = vadd.f32 %v906, %v1098
        %1100 = vmatprep.mubr.bf16.mxu0 %v580
        %1101 = vmatmul.mubr.bf16.gmra.mxu0 %v579
        %v1102 = vpop.f32.mrf.mxu0
        %v1103 = vadd.f32 %v910, %v1102
        %v1104 = vpop.f32.mrf.mxu0
        %v1105 = vadd.f32 %v912, %v1104
        %v1106 = vpop.f32.mrf.mxu0
        %v1107 = vadd.f32 %v914, %v1106
        %v1108 = vpop.f32.mrf.mxu0
        %v1109 = vadd.f32 %v916, %v1108
        %1110 = vmatprep.mubr.bf16.mxu0 %v584
        %1111 = vmatmul.mubr.bf16.gmra.mxu0 %v583
        %v1112 = vpop.f32.mrf.mxu0
        %v1113 = vadd.f32 %v920, %v1112
        %v1114 = vpop.f32.mrf.mxu0
        %v1115 = vadd.f32 %v922, %v1114
        %v1116 = vpop.f32.mrf.mxu0
        %v1117 = vadd.f32 %v924, %v1116
        %v1118 = vpop.f32.mrf.mxu0
        %v1119 = vadd.f32 %v926, %v1118
        %1120 = vmatprep.mubr.bf16.mxu0 %v588
        %1121 = vmatmul.mubr.bf16.gmra.mxu0 %v587
        %v1122 = vpop.f32.mrf.mxu0
        %v1123 = vadd.f32 %v930, %v1122
        %v1124 = vpop.f32.mrf.mxu0
        %v1125 = vadd.f32 %v932, %v1124
        %v1126 = vpop.f32.mrf.mxu0
        %v1127 = vadd.f32 %v934, %v1126
        %v1128 = vpop.f32.mrf.mxu0
        %v1129 = vadd.f32 %v936, %v1128
        %1130 = vmatprep.mubr.bf16.mxu0 %v592
        %1131 = vmatmul.mubr.bf16.gmra.mxu0 %v591
        %v1132 = vpop.f32.mrf.mxu0
        %v1133 = vadd.f32 %v940, %v1132
        %v1134 = vpop.f32.mrf.mxu0
        %v1135 = vadd.f32 %v942, %v1134
        %v1136 = vpop.f32.mrf.mxu0
        %v1137 = vadd.f32 %v944, %v1136
        %v1138 = vpop.f32.mrf.mxu0
        %v1139 = vadd.f32 %v946, %v1138
        %1140 = vmatprep.mubr.bf16.mxu0 %v596
        %1141 = vmatmul.mubr.bf16.gmra.mxu0 %v595
        %v1142 = vpop.f32.mrf.mxu0
        %v1143 = vadd.f32 %v950, %v1142
        %v1144 = vpop.f32.mrf.mxu0
        %v1145 = vadd.f32 %v952, %v1144
        %v1146 = vpop.f32.mrf.mxu0
        %v1147 = vadd.f32 %v954, %v1146
        %v1148 = vpop.f32.mrf.mxu0
        %v1149 = vadd.f32 %v956, %v1148
        %1150 = vmatprep.mubr.bf16.mxu0 %v600
        %1151 = vmatmul.mubr.bf16.gmra.mxu0 %v599
        %v1152 = vpop.f32.mrf.mxu0
        %v1153 = vadd.f32 %v960, %v1152
        %v1154 = vpop.f32.mrf.mxu0
        %v1155 = vadd.f32 %v962, %v1154
        %v1156 = vpop.f32.mrf.mxu0
        %v1157 = vadd.f32 %v964, %v1156
        %v1158 = vpop.f32.mrf.mxu0
        %v1159 = vadd.f32 %v966, %v1158
        %1160 = vmatprep.mubr.bf16.mxu0 %v604
        %1161 = vmatmul.mubr.bf16.gmra.mxu0 %v603
        %v1162 = vpop.f32.mrf.mxu0
        %v1163 = vadd.f32 %v970, %v1162
        %v1164 = vpop.f32.mrf.mxu0
        %v1165 = vadd.f32 %v972, %v1164
        %v1166 = vpop.f32.mrf.mxu0
        %v1167 = vadd.f32 %v974, %v1166
        %v1168 = vpop.f32.mrf.mxu0
        %v1169 = vadd.f32 %v976, %v1168
        %1170 = vmatprep.mubr.bf16.mxu0 %v608
        %1171 = vmatmul.mubr.bf16.gmra.mxu0 %v607
        %v1172 = vpop.f32.mrf.mxu0
        %v1173 = vadd.f32 %v980, %v1172
        %v1174 = vpop.f32.mrf.mxu0
        %v1175 = vadd.f32 %v982, %v1174
        %v1176 = vpop.f32.mrf.mxu0
        %v1177 = vadd.f32 %v984, %v1176
        %v1178 = vpop.f32.mrf.mxu0
        %v1179 = vadd.f32 %v986, %v1178
        %1180 = vmatprep.mubr.bf16.mxu0 %v612
        %1181 = vmatmul.mubr.bf16.gmra.mxu0 %v611
        %v1182 = vpop.f32.mrf.mxu0
        %v1183 = vadd.f32 %v990, %v1182
        %v1184 = vpop.f32.mrf.mxu0
        %v1185 = vadd.f32 %v992, %v1184
        %v1186 = vpop.f32.mrf.mxu0
        %v1187 = vadd.f32 %v994, %v1186
        %v1188 = vpop.f32.mrf.mxu0
        %v1189 = vadd.f32 %v996, %v1188
        %1190 = vdwg.mxu0
        %1191 = vst [vmem:[%s152] sm:$0xff] %v1033
        %1192 = vst [vmem:[%s152 + $0x8] sm:$0xff] %v1035
        %1193 = vst [vmem:[%s152 + $0x10] sm:$0xff] %v1037
        %1194 = vst [vmem:[%s152 + $0x18] sm:$0xff] %v1039
        %1195 = vst [vmem:[%s152 + $0x20] sm:$0xff] %v1043
        %1196 = vst [vmem:[%s152 + $0x28] sm:$0xff] %v1045
        %1197 = vst [vmem:[%s152 + $0x30] sm:$0xff] %v1047
        %1198 = vst [vmem:[%s152 + $0x38] sm:$0xff] %v1049
        %1199 = vst [vmem:[%s152 + $0x40] sm:$0xff] %v1053
        %1200 = vst [vmem:[%s152 + $0x48] sm:$0xff] %v1055
        %1201 = vst [vmem:[%s152 + $0x50] sm:$0xff] %v1057
        %1202 = vst [vmem:[%s152 + $0x58] sm:$0xff] %v1059
        %1203 = vst [vmem:[%s152 + $0x60] sm:$0xff] %v1063
        %1204 = vst [vmem:[%s152 + $0x68] sm:$0xff] %v1065
        %1205 = vst [vmem:[%s152 + $0x70] sm:$0xff] %v1067
        %1206 = vst [vmem:[%s152 + $0x78] sm:$0xff] %v1069
        %1207 = vst [vmem:[%s152 + $0x80] sm:$0xff] %v1073
        %1208 = vst [vmem:[%s152 + $0x88] sm:$0xff] %v1075
        %1209 = vst [vmem:[%s152 + $0x90] sm:$0xff] %v1077
        %1210 = vst [vmem:[%s152 + $0x98] sm:$0xff] %v1079
        %1211 = vst [vmem:[%s152 + $0xa0] sm:$0xff] %v1083
        %1212 = vst [vmem:[%s152 + $0xa8] sm:$0xff] %v1085
        %1213 = vst [vmem:[%s152 + $0xb0] sm:$0xff] %v1087
        %1214 = vst [vmem:[%s152 + $0xb8] sm:$0xff] %v1089
        %1215 = vst [vmem:[%s152 + $0xc0] sm:$0xff] %v1093
        %1216 = vst [vmem:[%s152 + $0xc8] sm:$0xff] %v1095
        %1217 = vst [vmem:[%s152 + $0xd0] sm:$0xff] %v1097
        %1218 = vst [vmem:[%s152 + $0xd8] sm:$0xff] %v1099
        %1219 = vst [vmem:[%s152 + $0xe0] sm:$0xff] %v1103
        %1220 = vst [vmem:[%s152 + $0xe8] sm:$0xff] %v1105
        %1221 = vst [vmem:[%s152 + $0xf0] sm:$0xff] %v1107
        %1222 = vst [vmem:[%s152 + $0xf8] sm:$0xff] %v1109
        %1223 = vst [vmem:[%s152 + $0x100] sm:$0xff] %v1113
        %1224 = vst [vmem:[%s152 + $0x108] sm:$0xff] %v1115
        %1225 = vst [vmem:[%s152 + $0x110] sm:$0xff] %v1117
        %1226 = vst [vmem:[%s152 + $0x118] sm:$0xff] %v1119
        %1227 = vst [vmem:[%s152 + $0x120] sm:$0xff] %v1123
        %1228 = vst [vmem:[%s152 + $0x128] sm:$0xff] %v1125
        %1229 = vst [vmem:[%s152 + $0x130] sm:$0xff] %v1127
        %1230 = vst [vmem:[%s152 + $0x138] sm:$0xff] %v1129
        %1231 = vst [vmem:[%s152 + $0x140] sm:$0xff] %v1133
        %1232 = vst [vmem:[%s152 + $0x148] sm:$0xff] %v1135
        %1233 = vst [vmem:[%s152 + $0x150] sm:$0xff] %v1137
        %1234 = vst [vmem:[%s152 + $0x158] sm:$0xff] %v1139
        %1235 = vst [vmem:[%s152 + $0x160] sm:$0xff] %v1143
        %1236 = vst [vmem:[%s152 + $0x168] sm:$0xff] %v1145
        %1237 = vst [vmem:[%s152 + $0x170] sm:$0xff] %v1147
        %1238 = vst [vmem:[%s152 + $0x178] sm:$0xff] %v1149
        %1239 = vst [vmem:[%s152 + $0x180] sm:$0xff] %v1153
        %1240 = vst [vmem:[%s152 + $0x188] sm:$0xff] %v1155
        %1241 = vst [vmem:[%s152 + $0x190] sm:$0xff] %v1157
        %1242 = vst [vmem:[%s152 + $0x198] sm:$0xff] %v1159
        %1243 = vst [vmem:[%s152 + $0x1a0] sm:$0xff] %v1163
        %1244 = vst [vmem:[%s152 + $0x1a8] sm:$0xff] %v1165
        %1245 = vst [vmem:[%s152 + $0x1b0] sm:$0xff] %v1167
        %1246 = vst [vmem:[%s152 + $0x1b8] sm:$0xff] %v1169
        %1247 = vst [vmem:[%s152 + $0x1c0] sm:$0xff] %v1173
        %1248 = vst [vmem:[%s152 + $0x1c8] sm:$0xff] %v1175
        %1249 = vst [vmem:[%s152 + $0x1d0] sm:$0xff] %v1177
        %1250 = vst [vmem:[%s152 + $0x1d8] sm:$0xff] %v1179
        %1251 = vst [vmem:[%s152 + $0x1e0] sm:$0xff] %v1183
        %1252 = vst [vmem:[%s152 + $0x1e8] sm:$0xff] %v1185
        %1253 = vst [vmem:[%s152 + $0x1f0] sm:$0xff] %v1187
        %1254 = vst [vmem:[%s152 + $0x1f8] sm:$0xff] %v1189
        %s1255 = sand.u32 %s72, 1
        %s1256 = scalar_lea.sflag [#allocation4], %s1255
        %s1257 = sand.u32 %s72, 1
        %s1258 = smul.addr %s1257, 512
        %s1259 = scalar_lea.vmem [#allocation5], %s1258
        // Predicated region
        $region33: #{tpu_custom_call.1} parent=27 // pred_check
          %p1260 = pneg %p82
        $region34: #{tpu_custom_call.1} parent=27 // pred_check_branch
          %1262 = sbr.rel (%p1260) target = $region36
        $region35: #{tpu_custom_call.1} parent=27 // pred_region
          %s1263 = smul.u32 32, %s17
          %s1265 = ssub.s32 8192, 8192
          %1266 = vsyncadd %s1256, %s1265
          %s1267 = smul.addr %s1263, 2
          %s1268 = smul.addr %s1267, 128
          %s1269 = scalar_lea.hbm %s2, %s1268
          %s1270 = sshll.u32 %s1259, 4
          %s1271 = int_to_ptr.vmem [resolvable:$true] %s1270
          %1276 = dma.vmem_to_hbm [thread:$0]  %s1271, 8192, %s1269, %s1256, 256, 256, 16
        $region36: #{tpu_custom_call.1} parent=27 // pred_fallthru
          _
      $region28: #{tpu_custom_call.1} parent=5 // pred_fallthru
        _
      %p1277 = scmp.le.s32.totalorder 2, %s12
      // Predicated region
      $region37: #{tpu_custom_call.1} parent=5 // pred_check
        %p1278 = pneg %p1277
      $region38: #{tpu_custom_call.1} parent=5 // pred_check_branch
        %1280 = sbr.rel (%p1278) target = $region40
      $region39: #{tpu_custom_call.1} parent=5 // pred_region
        %s1281 = ssub.s32 %s12, 2
        // Predicated region
        $region41: #{tpu_custom_call.1} parent=39 // pred_check
          %p1282 = pneg %p88
        $region42: #{tpu_custom_call.1} parent=39 // pred_check_branch
          %1284 = sbr.rel (%p1282) target = $region44
        $region43: #{tpu_custom_call.1} parent=39 // pred_region
          %s1285 = sand.u32 %s73, 1
          %s1286 = scalar_lea.sflag [#allocation4], %s1285
          %s1287 = sand.u32 %s73, 1
          %s1288 = smul.addr %s1287, 512
          %s1289 = scalar_lea.vmem [#allocation5], %s1288
          %1290 = dma.done %s1286, 8192
        $region44: #{tpu_custom_call.1} parent=39 // pred_fallthru
          _
      $region40: #{tpu_custom_call.1} parent=5 // pred_fallthru
        _
    $region6: #{tpu_custom_call.1} parent=1 // loop_footer
      %s16 = sadd.s32 1, %s12
    $region7: #{tpu_custom_call.1} parent=1 // loop_footer_branch
      %11 = sbr.rel target = $region3
    $region8: #{tpu_custom_call.1} parent=1 // loop_exit
      _
    %1291 = vsyncpa [#allocation3], 1
    %s1292 = scalar_lea.sflag [#allocation3], 1
    %1293 = vsyncpa %s1292, 1
    %1294 = vsyncpa [#allocation4], 1
    %s1295 = scalar_lea.sflag [#allocation4], 1
    %1296 = vsyncpa %s1295, 1

</llo_original>
